<compile_context>
chip_gen: v7x
topology: tpu7x:2x2x1
jax: 0.10.0
libtpu: 0.0.40
codegen_flags: <defaults>
</compile_context>

<pallas_src>
import functools

import jax
import jax.numpy as jnp
from jax.experimental import pallas as pl
from jax.experimental.pallas import tpu as pltpu


# ---------------------------------------------------------------------------
# Kernel
# ---------------------------------------------------------------------------
def _gcn_kernel(a_ref, dinv_ref, x_ref, w1_ref, b1_ref, w2_ref, b2_ref,
                out_ref, *, num_classes):
    a = a_ref[0]                      # [NP, NP] bf16 raw A_hat (exact counts)
    dinv = dinv_ref[0]                # [NP, 1]  f32 deg^-1/2 (0 on padded rows)
    x = x_ref[0]                      # [NP, FP] f32

    # ---- GCNConv 1:  dinv * (A_hat @ (dinv * (x @ W1))) + b1 , then ReLU ----
    h = jnp.dot(x, w1_ref[...], preferred_element_type=jnp.float32)   # [NP,HP]
    h = (dinv * h).astype(a.dtype)                                     # bf16 for MXU
    h = jnp.dot(a, h, preferred_element_type=jnp.float32)              # f32 acc
    h = dinv * h + b1_ref[...]
    h = jnp.maximum(h, 0.0)

    # ---- GCNConv 2 ----
    z = jnp.dot(h, w2_ref[...], preferred_element_type=jnp.float32)    # [NP,CP]
    z = (dinv * z).astype(a.dtype)
    z = jnp.dot(a, z, preferred_element_type=jnp.float32)
    z = dinv * z + b2_ref[...]

    # ---- log_softmax over the REAL class lanes only (padding masked off) ----
    col = jax.lax.broadcasted_iota(jnp.int32, z.shape, 1)
    valid = col < num_classes
    zm = jnp.where(valid, z, jnp.float32(-1e30))
    m = jnp.max(zm, axis=1, keepdims=True)
    e = jnp.exp(zm - m)
    lse = jnp.log(jnp.sum(e, axis=1, keepdims=True))
    out_ref[0] = zm - m - lse


# ---------------------------------------------------------------------------
# Pallas launcher (batched over graphs)
# ---------------------------------------------------------------------------
def _gcn_pallas(a_hat, dinv, x, w1, b1, w2, b2, *, num_classes):
    """a_hat: [B,NP,NP] bf16, dinv: [B,NP,1] f32, x: [B,NP,FP] f32,
    w1: [FP,HP], b1: [1,HP], w2: [HP,CP], b2: [1,CP] (all f32, lane-padded)."""
    bsz, n_p, _ = a_hat.shape
    f_p = x.shape[-1]
    h_p = w1.shape[-1]
    c_p = w2.shape[-1]

    flops = 2 * bsz * (n_p * f_p * h_p + n_p * n_p * h_p
                       + n_p * h_p * c_p + n_p * n_p * c_p)
    bytes_accessed = (a_hat.size * 2 + x.size * 4 + dinv.size * 4
                      + (w1.size + b1.size + w2.size + b2.size) * 4
                      + bsz * n_p * c_p * 4)
    cost = pl.CostEstimate(flops=flops,
                           transcendentals=bsz * n_p * (c_p + 1),
                           bytes_accessed=bytes_accessed)

    kernel = functools.partial(_gcn_kernel, num_classes=num_classes)
    return pl.pallas_call(
        kernel,
        out_shape=jax.ShapeDtypeStruct((bsz, n_p, c_p), jnp.float32),
        grid_spec=pltpu.PrefetchScalarGridSpec(
            num_scalar_prefetch=0,
            grid=(bsz,),
            in_specs=[
                pl.BlockSpec((1, n_p, n_p), lambda b: (b, 0, 0)),   # A_hat (bf16)
                pl.BlockSpec((1, n_p, 1), lambda b: (b, 0, 0)),     # dinv
                pl.BlockSpec((1, n_p, f_p), lambda b: (b, 0, 0)),   # x
                pl.BlockSpec((f_p, h_p), lambda b: (0, 0)),         # W1 (shared)
                pl.BlockSpec((1, h_p), lambda b: (0, 0)),           # b1
                pl.BlockSpec((h_p, c_p), lambda b: (0, 0)),         # W2
                pl.BlockSpec((1, c_p), lambda b: (0, 0)),           # b2
            ],
            out_specs=pl.BlockSpec((1, n_p, c_p), lambda b: (b, 0, 0)),
        ),
        compiler_params=pltpu.CompilerParams(
            dimension_semantics=("parallel",)),
        cost_estimate=cost,
    )(a_hat, dinv, x, w1, b1, w2, b2)


# ---------------------------------------------------------------------------
# Glue: padding + dense graph build
# ---------------------------------------------------------------------------
def _round_up(v, m):
    return ((v + m - 1) // m) * m


def _pad2d(a, rows, cols):
    return jnp.zeros((rows, cols), a.dtype).at[:a.shape[0], :a.shape[1]].set(a)


def _build_dense_graph(x, edge_index, n_pad, f_pad):
    """Raw A_hat (bf16, exact integer counts), deg^-1/2 and padded features."""
    n = x.shape[0]
    src, dst = edge_index[0], edge_index[1]
    adj = jnp.zeros((n_pad, n_pad), jnp.float32).at[dst, src].add(1.0)
    diag = jnp.arange(n)
    adj = adj.at[diag, diag].add(1.0)                     # self loops (real nodes)
    deg = jnp.sum(adj, axis=1)
    dinv = jnp.where(deg > 0, jax.lax.rsqrt(deg), 0.0)[:, None]   # [n_pad, 1]
    return adj.astype(jnp.bfloat16), dinv, _pad2d(x, n_pad, f_pad)


def _pad_params(w1, b1, w2, b2, f_pad, h_pad, c_pad):
    w1p = _pad2d(w1, f_pad, h_pad)
    b1p = _pad2d(b1.reshape(1, -1), 1, h_pad)
    w2p = _pad2d(w2, h_pad, c_pad)
    b2p = _pad2d(b2.reshape(1, -1), 1, c_pad)
    return w1p, b1p, w2p, b2p


def pyg_gcn_forward(x, edge_index, w1, b1, w2, b2):
    """Single-graph forward matching PyGGCN.forward(x, edge_index)."""
    n, f = x.shape
    hid = w1.shape[1]
    num_classes = w2.shape[1]
    n_pad = max(_round_up(n, 8), 8)
    f_pad = max(_round_up(f, 128), 128)
    h_pad = max(_round_up(hid, 128), 128)
    c_pad = max(_round_up(num_classes, 128), 128)

    a_hat, dinv, x_p = _build_dense_graph(x, edge_index, n_pad, f_pad)
    w1p, b1p, w2p, b2p = _pad_params(w1, b1, w2, b2, f_pad, h_pad, c_pad)

    out = _gcn_pallas(a_hat[None], dinv[None], x_p[None],
                      w1p, b1p, w2p, b2p, num_classes=num_classes)
    return out[0, :n, :num_classes]


def pyg_gcn_forward_batched(xs, edge_indices, w1, b1, w2, b2):
    """Run many graphs (same node/feature count) through one pallas_call."""
    n, f = xs[0].shape
    hid = w1.shape[1]
    num_classes = w2.shape[1]
    n_pad = max(_round_up(n, 8), 8)
    f_pad = max(_round_up(f, 128), 128)
    h_pad = max(_round_up(hid, 128), 128)
    c_pad = max(_round_up(num_classes, 128), 128)

    dense = [_build_dense_graph(xi, ei, n_pad, f_pad)
             for xi, ei in zip(xs, edge_indices)]
    a_hat = jnp.stack([d[0] for d in dense], 0)
    dinv = jnp.stack([d[1] for d in dense], 0)
    x_p = jnp.stack([d[2] for d in dense], 0)
    w1p, b1p, w2p, b2p = _pad_params(w1, b1, w2, b2, f_pad, h_pad, c_pad)

    out = _gcn_pallas(a_hat, dinv, x_p, w1p, b1p, w2p, b2p,
                      num_classes=num_classes)
    return out[:, :n, :num_classes]


# ---------------------------------------------------------------------------
# Pure-JAX reference (f32 dense path) and init
# ---------------------------------------------------------------------------
def gcn_reference(x, edge_index, w1, b1, w2, b2):
    n = x.shape[0]
    src, dst = edge_index[0], edge_index[1]
    adj = (jnp.zeros((n, n), jnp.float32).at[dst, src].add(1.0)
           + jnp.eye(n, dtype=jnp.float32))
    deg = jnp.sum(adj, axis=1)
    dinv = jnp.where(deg > 0, jax.lax.rsqrt(deg), 0.0)
    a_norm = dinv[:, None] * adj * dinv[None, :]
    h = jnp.maximum(a_norm @ (x @ w1) + b1, 0.0)
    z = a_norm @ (h @ w2) + b2
    return jax.nn.log_softmax(z, axis=1)


def init_params(key, num_features, hidden, num_classes):
    """Deterministic glorot-style weights, zero biases (GCNConv-like init)."""
    k1, k2 = jax.random.split(key)
    lim1 = jnp.sqrt(6.0 / (num_features + hidden))
    lim2 = jnp.sqrt(6.0 / (hidden + num_classes))
    w1 = jax.random.uniform(k1, (num_features, hidden), jnp.float32, -lim1, lim1)
    w2 = jax.random.uniform(k2, (hidden, num_classes), jnp.float32, -lim2, lim2)
    b1 = jnp.zeros((1, hidden), jnp.float32)
    b2 = jnp.zeros((1, num_classes), jnp.float32)
    return w1, b1, w2, b2


# ---------------------------------------------------------------------------
if __name__ == "__main__":
    NUM_NODES = 32
    NUM_FEATURES = 16
    HIDDEN = 16            # conv1 output size, fixed to 16 in the module
    NUM_CLASSES = 4
    NUM_EDGES = 64

    key = jax.random.PRNGKey(0)
    kx, ke, kp = jax.random.split(key, 3)

    def make_graph(kx_i, ke_i):
        xi = jax.random.normal(kx_i, (NUM_NODES, NUM_FEATURES), jnp.float32)
        si = jax.random.randint(ke_i, (NUM_EDGES,), 0, NUM_NODES, dtype=jnp.int32)
        di = (si + 1 + jax.random.randint(
            jax.random.fold_in(ke_i, 1), (NUM_EDGES,), 0, NUM_NODES - 1,
            dtype=jnp.int32)) % NUM_NODES
        return xi, jnp.stack([si, di], axis=0)

    x, edge_index = make_graph(kx, ke)
    w1, b1, w2, b2 = init_params(kp, NUM_FEATURES, HIDDEN, NUM_CLASSES)

    # ---- single-graph forward (module semantics) ----
    fwd = jax.jit(pyg_gcn_forward)
    out = fwd(x, edge_index, w1, b1, w2, b2)
    jax.block_until_ready(out)
    assert out.shape == (NUM_NODES, NUM_CLASSES)

    ref = gcn_reference(x, edge_index, w1, b1, w2, b2)
    # bf16 aggregation operands (f32 accumulate) -> small logit drift allowed
    assert float(jnp.max(jnp.abs(out - ref))) < 1e-1
    row_sums = jnp.sum(jnp.exp(out), axis=1)
    assert bool(jnp.all(jnp.abs(row_sums - 1.0) < 1e-4))

    # ---- batched path: several graphs in one pallas_call (parallel grid) ----
    B = 4
    graphs = [make_graph(jax.random.fold_in(kx, i + 1),
                         jax.random.fold_in(ke, i + 7)) for i in range(B)]
    out_b = pyg_gcn_forward_batched([g[0] for g in graphs],
                                    [g[1] for g in graphs],
                                    w1, b1, w2, b2)
    jax.block_until_ready(out_b)
    assert out_b.shape == (B, NUM_NODES, NUM_CLASSES)
    for i in range(B):
        ref_i = gcn_reference(graphs[i][0], graphs[i][1], w1, b1, w2, b2)
        assert float(jnp.max(jnp.abs(out_b[i] - ref_i))) < 1e-1

    print("KERNEL_OK")
</pallas_src>

<mosaic_0001>
module attributes {stable_mosaic.version = 11 : i64} {
  func.func private @main(%arg0: i32) attributes {dimension_semantics = [#tpu.dimension_semantics<core_parallel>], iteration_bounds = array<i64: 2>, tpu.core_type = #tpu.core_type<sc_scalar_subcore>, window_params = []} {
    return
  }
}

module attributes {stable_mosaic.version = 11 : i64} {
  func.func private @main(%arg0: i32) attributes {dimension_semantics = [#tpu.dimension_semantics<core_parallel>], iteration_bounds = array<i64: 2>, tpu.core_type = #tpu.core_type<sc_scalar_subcore>, window_params = []} {
    return
  }
}

module attributes {stable_mosaic.version = 11 : i64} {
  func.func @_gcn_kernel(%arg0: i32, %arg1: memref<1x32x32xbf16, #tpu.memory_space<vmem>>, %arg2: memref<1x32x1xf32, #tpu.memory_space<vmem>>, %arg3: memref<1x32x128xf32, #tpu.memory_space<vmem>>, %arg4: memref<128x128xf32, #tpu.memory_space<vmem>>, %arg5: memref<1x128xf32, #tpu.memory_space<vmem>>, %arg6: memref<128x128xf32, #tpu.memory_space<vmem>>, %arg7: memref<1x128xf32, #tpu.memory_space<vmem>>, %arg8: memref<1x32x128xf32, #tpu.memory_space<vmem>>) attributes {dimension_semantics = [#tpu.dimension_semantics<parallel>], iteration_bounds = array<i64: 1>, scalar_prefetch = 0 : i64, scratch_operands = 0 : i64, tpu.core_type = #tpu.core_type<tc>, window_params = [{transform_indices = @transform_0, window_bounds = array<i64: 1, 32, 32>}, {transform_indices = @transform_1, window_bounds = array<i64: 1, 32, 1>}, {transform_indices = @transform_2, window_bounds = array<i64: 1, 32, 128>}, {pipeline_mode = #tpu.pipeline_mode<synchronous>, transform_indices = @transform_3, window_bounds = array<i64: 128, 128>}, {pipeline_mode = #tpu.pipeline_mode<synchronous>, transform_indices = @transform_4, window_bounds = array<i64: 1, 128>}, {pipeline_mode = #tpu.pipeline_mode<synchronous>, transform_indices = @transform_5, window_bounds = array<i64: 128, 128>}, {pipeline_mode = #tpu.pipeline_mode<synchronous>, transform_indices = @transform_6, window_bounds = array<i64: 1, 128>}, {transform_indices = @transform_7, window_bounds = array<i64: 1, 32, 128>}]} {
    %c0 = arith.constant 0 : index
    %c0_0 = arith.constant 0 : index
    %c0_1 = arith.constant 0 : index
    %0 = vector.load %arg1[%c0, %c0_0, %c0_1] : memref<1x32x32xbf16, #tpu.memory_space<vmem>>, vector<1x32x32xbf16>
    %1 = vector.shape_cast %0 : vector<1x32x32xbf16> to vector<32x32xbf16>
    %c0_2 = arith.constant 0 : index
    %c0_3 = arith.constant 0 : index
    %c0_4 = arith.constant 0 : index
    %2 = vector.load %arg2[%c0_2, %c0_3, %c0_4] : memref<1x32x1xf32, #tpu.memory_space<vmem>>, vector<1x32x1xf32>
    %3 = vector.shape_cast %2 : vector<1x32x1xf32> to vector<32x1xf32>
    %c0_5 = arith.constant 0 : index
    %c0_6 = arith.constant 0 : index
    %c0_7 = arith.constant 0 : index
    %4 = vector.load %arg3[%c0_5, %c0_6, %c0_7] : memref<1x32x128xf32, #tpu.memory_space<vmem>>, vector<1x32x128xf32>
    %5 = vector.shape_cast %4 : vector<1x32x128xf32> to vector<32x128xf32>
    %c0_8 = arith.constant 0 : index
    %c0_9 = arith.constant 0 : index
    %6 = vector.load %arg4[%c0_8, %c0_9] : memref<128x128xf32, #tpu.memory_space<vmem>>, vector<128x128xf32>
    %cst = arith.constant dense<0.000000e+00> : vector<32x128xf32>
    %7 = tpu.matmul %5, %6, %cst {dimension_numbers = #tpu.dot_dimension_numbers<[1], [0], [0], [1], [0, 0, 1, 1], [], []>} : vector<32x128xf32>, vector<128x128xf32>, vector<32x128xf32> -> vector<32x128xf32>
    %8 = vector.broadcast %3 : vector<32x1xf32> to vector<32x128xf32>
    %9 = arith.mulf %8, %7 : vector<32x128xf32>
    %10 = arith.truncf %9 : vector<32x128xf32> to vector<32x128xbf16>
    %cst_10 = arith.constant dense<0.000000e+00> : vector<32x128xf32>
    %11 = tpu.matmul %1, %10, %cst_10 {dimension_numbers = #tpu.dot_dimension_numbers<[1], [0], [0], [1], [0, 0, 1, 1], [], []>} : vector<32x32xbf16>, vector<32x128xbf16>, vector<32x128xf32> -> vector<32x128xf32>
    %12 = vector.broadcast %3 : vector<32x1xf32> to vector<32x128xf32>
    %13 = arith.mulf %12, %11 : vector<32x128xf32>
    %c0_11 = arith.constant 0 : index
    %c0_12 = arith.constant 0 : index
    %14 = vector.load %arg5[%c0_11, %c0_12] : memref<1x128xf32, #tpu.memory_space<vmem>>, vector<1x128xf32>
    %15 = vector.broadcast %14 : vector<1x128xf32> to vector<32x128xf32>
    %16 = arith.addf %13, %15 : vector<32x128xf32>
    %cst_13 = arith.constant 0.000000e+00 : f32
    %17 = vector.broadcast %cst_13 : f32 to vector<32x128xf32>
    %18 = arith.maximumf %16, %17 : vector<32x128xf32>
    %c0_14 = arith.constant 0 : index
    %c0_15 = arith.constant 0 : index
    %19 = vector.load %arg6[%c0_14, %c0_15] : memref<128x128xf32, #tpu.memory_space<vmem>>, vector<128x128xf32>
    %cst_16 = arith.constant dense<0.000000e+00> : vector<32x128xf32>
    %20 = tpu.matmul %18, %19, %cst_16 {dimension_numbers = #tpu.dot_dimension_numbers<[1], [0], [0], [1], [0, 0, 1, 1], [], []>} : vector<32x128xf32>, vector<128x128xf32>, vector<32x128xf32> -> vector<32x128xf32>
    %21 = vector.broadcast %3 : vector<32x1xf32> to vector<32x128xf32>
    %22 = arith.mulf %21, %20 : vector<32x128xf32>
    %23 = arith.truncf %22 : vector<32x128xf32> to vector<32x128xbf16>
    %cst_17 = arith.constant dense<0.000000e+00> : vector<32x128xf32>
    %24 = tpu.matmul %1, %23, %cst_17 {dimension_numbers = #tpu.dot_dimension_numbers<[1], [0], [0], [1], [0, 0, 1, 1], [], []>} : vector<32x32xbf16>, vector<32x128xbf16>, vector<32x128xf32> -> vector<32x128xf32>
    %25 = vector.broadcast %3 : vector<32x1xf32> to vector<32x128xf32>
    %26 = arith.mulf %25, %24 : vector<32x128xf32>
    %c0_18 = arith.constant 0 : index
    %c0_19 = arith.constant 0 : index
    %27 = vector.load %arg7[%c0_18, %c0_19] : memref<1x128xf32, #tpu.memory_space<vmem>>, vector<1x128xf32>
    %28 = vector.broadcast %27 : vector<1x128xf32> to vector<32x128xf32>
    %29 = arith.addf %26, %28 : vector<32x128xf32>
    %30 = tpu.iota {dimensions = array<i32: 1>} : vector<32x128xi32>
    %c4_i32 = arith.constant 4 : i32
    %31 = vector.broadcast %c4_i32 : i32 to vector<32x128xi32>
    %32 = arith.cmpi slt, %30, %31 : vector<32x128xi32>
    %cst_20 = arith.constant -1.000000e+30 : f32
    %33 = vector.broadcast %cst_20 : f32 to vector<32x128xf32>
    %34 = arith.select %32, %29, %33 : vector<32x128xi1>, vector<32x128xf32>
    %cst_21 = arith.constant dense<0xFF800000> : vector<32xf32>
    %35 = vector.multi_reduction <maximumf>, %34, %cst_21 [1] : vector<32x128xf32> to vector<32xf32>
    %36 = vector.shape_cast %35 : vector<32xf32> to vector<32x1xf32>
    %37 = vector.broadcast %36 : vector<32x1xf32> to vector<32x128xf32>
    %38 = arith.subf %34, %37 : vector<32x128xf32>
    %39 = math.exp %38 : vector<32x128xf32>
    %cst_22 = arith.constant dense<0.000000e+00> : vector<32xf32>
    %40 = vector.multi_reduction <add>, %39, %cst_22 [1] : vector<32x128xf32> to vector<32xf32>
    %41 = vector.shape_cast %40 : vector<32xf32> to vector<32x1xf32>
    %42 = math.log %41 : vector<32x1xf32>
    %43 = vector.broadcast %36 : vector<32x1xf32> to vector<32x128xf32>
    %44 = arith.subf %34, %43 : vector<32x128xf32>
    %45 = vector.broadcast %42 : vector<32x1xf32> to vector<32x128xf32>
    %46 = arith.subf %44, %45 : vector<32x128xf32>
    %c0_23 = arith.constant 0 : index
    %c0_24 = arith.constant 0 : index
    %c0_25 = arith.constant 0 : index
    %47 = vector.load %arg8[%c0_23, %c0_24, %c0_25] : memref<1x32x128xf32, #tpu.memory_space<vmem>>, vector<1x32x128xf32>
    %48 = vector.shape_cast %47 : vector<1x32x128xf32> to vector<32x128xf32>
    %49 = vector.shape_cast %46 : vector<32x128xf32> to vector<1x32x128xf32>
    tpu.vector_store %arg8[%c0_23, %c0_24, %c0_25], %49 {strides = array<i32>} : memref<1x32x128xf32, #tpu.memory_space<vmem>>, vector<1x32x128xf32>,
    return
  }
  func.func @transform_0(%arg0: i32) -> (i32, i32, i32) {
    %c0_i32 = arith.constant 0 : i32
    %c0_i32_0 = arith.constant 0 : i32
    %c0_i32_1 = arith.constant 0 : i32
    return %arg0, %c0_i32, %c0_i32_0 : i32, i32, i32
  }
  func.func @transform_1(%arg0: i32) -> (i32, i32, i32) {
    %c0_i32 = arith.constant 0 : i32
    %c0_i32_0 = arith.constant 0 : i32
    %c0_i32_1 = arith.constant 0 : i32
    return %arg0, %c0_i32, %c0_i32_0 : i32, i32, i32
  }
  func.func @transform_2(%arg0: i32) -> (i32, i32, i32) {
    %c0_i32 = arith.constant 0 : i32
    %c0_i32_0 = arith.constant 0 : i32
    %c0_i32_1 = arith.constant 0 : i32
    return %arg0, %c0_i32, %c0_i32_0 : i32, i32, i32
  }
  func.func @transform_3(%arg0: i32) -> (i32, i32) {
    %c0_i32 = arith.constant 0 : i32
    %c0_i32_0 = arith.constant 0 : i32
    %c0_i32_1 = arith.constant 0 : i32
    return %c0_i32, %c0_i32_0 : i32, i32
  }
  func.func @transform_4(%arg0: i32) -> (i32, i32) {
    %c0_i32 = arith.constant 0 : i32
    %c0_i32_0 = arith.constant 0 : i32
    %c0_i32_1 = arith.constant 0 : i32
    return %c0_i32, %c0_i32_0 : i32, i32
  }
  func.func @transform_5(%arg0: i32) -> (i32, i32) {
    %c0_i32 = arith.constant 0 : i32
    %c0_i32_0 = arith.constant 0 : i32
    %c0_i32_1 = arith.constant 0 : i32
    return %c0_i32, %c0_i32_0 : i32, i32
  }
  func.func @transform_6(%arg0: i32) -> (i32, i32) {
    %c0_i32 = arith.constant 0 : i32
    %c0_i32_0 = arith.constant 0 : i32
    %c0_i32_1 = arith.constant 0 : i32
    return %c0_i32, %c0_i32_0 : i32, i32
  }
  func.func @transform_7(%arg0: i32) -> (i32, i32, i32) {
    %c0_i32 = arith.constant 0 : i32
    %c0_i32_0 = arith.constant 0 : i32
    %c0_i32_1 = arith.constant 0 : i32
    return %arg0, %c0_i32, %c0_i32_0 : i32, i32, i32
  }
}

</mosaic_0001>

<llo_original>
// kernel: pyg_gcn_forward.1
$region0: #{pyg_gcn_forward.1}
  #allocation0 [shape = 'u32[]', space=smem, size = 0x4, offset = 0x4, fixed_abs, tag = 'smem constant byte address 0x4 - core index']
  #allocation1 [shape = 'u32[144,128]{1,0:T(1,128)}', space=vmem, size = 0x12000, scoped, tag = 'internal scratch']
  %s0 = inlined_call_operand.vmem [shape: bf16[1,32,32], index: 0, kind: input, shape index: {}]
  %s1 = inlined_call_operand.vmem [shape: f32[1,32,1], index: 1, kind: input, shape index: {}]
  %s2 = inlined_call_operand.vmem [shape: f32[1,32,128], index: 2, kind: input, shape index: {}]
  %s3 = inlined_call_operand.vmem [shape: f32[128,128], index: 3, kind: input, shape index: {}]
  %s4 = inlined_call_operand.vmem [shape: f32[1,128], index: 4, kind: input, shape index: {}]
  %s5 = inlined_call_operand.vmem [shape: f32[128,128], index: 5, kind: input, shape index: {}]
  %s6 = inlined_call_operand.vmem [shape: f32[1,128], index: 6, kind: input, shape index: {}]
  %s7 = inlined_call_operand.vmem [shape: f32[1,32,128], index: 7, kind: output, shape index: {}]
  %s8 = sld [smem:[#allocation0]]
  $region38: #{pyg_gcn_forward.1} parent=0
    _
  %s10 = ssub.s32 1, %s8
  %s11 = scalar_select 0, %s10, %s8
  // Predicated region
  $region2: #{pyg_gcn_forward.1} parent=0 // pred_check
    _
  $region3: #{pyg_gcn_forward.1} parent=0 // pred_check_branch
    %13 = sbr.rel (0) target = $region5
  $region4: #{pyg_gcn_forward.1} parent=0 // pred_region
    _
  $region5: #{pyg_gcn_forward.1} parent=0 // pred_fallthru
    _
  // Predicated region
  $region6: #{pyg_gcn_forward.1} parent=0 // pred_check
    _
  $region7: #{pyg_gcn_forward.1} parent=0 // pred_check_branch
    %15 = sbr.rel (0) target = $region9
  $region8: #{pyg_gcn_forward.1} parent=0 // pred_region
    _
  $region9: #{pyg_gcn_forward.1} parent=0 // pred_fallthru
    _
  // Predicated region
  $region10: #{pyg_gcn_forward.1} parent=0 // pred_check
    _
  $region11: #{pyg_gcn_forward.1} parent=0 // pred_check_branch
    %17 = sbr.rel (0) target = $region13
  $region12: #{pyg_gcn_forward.1} parent=0 // pred_region
    _
  $region13: #{pyg_gcn_forward.1} parent=0 // pred_fallthru
    _
  // Predicated region
  $region14: #{pyg_gcn_forward.1} parent=0 // pred_check
    _
  $region15: #{pyg_gcn_forward.1} parent=0 // pred_check_branch
    %19 = sbr.rel (0) target = $region17
  $region16: #{pyg_gcn_forward.1} parent=0 // pred_region
    _
  $region17: #{pyg_gcn_forward.1} parent=0 // pred_fallthru
    _
  // Predicated region
  $region18: #{pyg_gcn_forward.1} parent=0 // pred_check
    _
  $region19: #{pyg_gcn_forward.1} parent=0 // pred_check_branch
    %21 = sbr.rel (0) target = $region21
  $region20: #{pyg_gcn_forward.1} parent=0 // pred_region
    _
  $region21: #{pyg_gcn_forward.1} parent=0 // pred_fallthru
    _
  // Predicated region
  $region22: #{pyg_gcn_forward.1} parent=0 // pred_check
    _
  $region23: #{pyg_gcn_forward.1} parent=0 // pred_check_branch
    %23 = sbr.rel (0) target = $region25
  $region24: #{pyg_gcn_forward.1} parent=0 // pred_region
    _
  $region25: #{pyg_gcn_forward.1} parent=0 // pred_fallthru
    _
  // Predicated region
  $region26: #{pyg_gcn_forward.1} parent=0 // pred_check
    _
  $region27: #{pyg_gcn_forward.1} parent=0 // pred_check_branch
    %25 = sbr.rel (0) target = $region29
  $region28: #{pyg_gcn_forward.1} parent=0 // pred_region
    _
  $region29: #{pyg_gcn_forward.1} parent=0 // pred_fallthru
    _
  %v27 = vld [vmem:[%s0] sm:$0xf]
  %v28 = vld [vmem:[%s0 + $0x4] sm:$0xf]
  %v29 = vld [vmem:[%s0 + $0x8] sm:$0xf]
  %v30 = vld [vmem:[%s0 + $0xc] sm:$0xf]
  %v31 = vld [vmem:[%s1] sm:$0xff]
  %v32 = vld [vmem:[%s1 + $0x8] sm:$0xff]
  %v33 = vld [vmem:[%s1 + $0x10] sm:$0xff]
  %v34 = vld [vmem:[%s1 + $0x18] sm:$0xff]
  %v35 = vld [vmem:[%s2] sm:$0xff]
  %v36 = vld [vmem:[%s2 + $0x8] sm:$0xff]
  %v37 = vld [vmem:[%s2 + $0x10] sm:$0xff]
  %v38 = vld [vmem:[%s2 + $0x18] sm:$0xff]
  %v39 = vld [vmem:[%s3] sm:$0xff]
  %v40 = vld [vmem:[%s3 + $0x8] sm:$0xff]
  %v41 = vld [vmem:[%s3 + $0x10] sm:$0xff]
  %v42 = vld [vmem:[%s3 + $0x18] sm:$0xff]
  %v43 = vld [vmem:[%s3 + $0x20] sm:$0xff]
  %v44 = vld [vmem:[%s3 + $0x28] sm:$0xff]
  %v45 = vld [vmem:[%s3 + $0x30] sm:$0xff]
  %v46 = vld [vmem:[%s3 + $0x38] sm:$0xff]
  %v47 = vld [vmem:[%s3 + $0x40] sm:$0xff]
  %v48 = vld [vmem:[%s3 + $0x48] sm:$0xff]
  %v49 = vld [vmem:[%s3 + $0x50] sm:$0xff]
  %v50 = vld [vmem:[%s3 + $0x58] sm:$0xff]
  %v51 = vld [vmem:[%s3 + $0x60] sm:$0xff]
  %v52 = vld [vmem:[%s3 + $0x68] sm:$0xff]
  %v53 = vld [vmem:[%s3 + $0x70] sm:$0xff]
  %v54 = vld [vmem:[%s3 + $0x78] sm:$0xff]
  %55 = vmatprep.subr.mxu0 0.0
  %56 = vmatpush1.msra.mxu0 %v39
  %57 = vmatprep.subr.mxu0 0.0
  %58 = vmatpush1.msra.mxu0 %v40
  %59 = vmatprep.subr.mxu0 0.0
  %60 = vmatpush1.msra.mxu0 %v41
  %61 = vmatprep.subr.mxu0 0.0
  %62 = vmatpush1.msra.mxu0 %v42
  %63 = vmatprep.subr.mxu0 0.0
  %64 = vmatpush1.msra.mxu0 %v43
  %65 = vmatprep.subr.mxu0 0.0
  %66 = vmatpush1.msra.mxu0 %v44
  %67 = vmatprep.subr.mxu0 0.0
  %68 = vmatpush1.msra.mxu0 %v45
  %69 = vmatprep.subr.mxu0 0.0
  %70 = vmatpush1.msra.mxu0 %v46
  %71 = vmatprep.subr.mxu0 0.0
  %72 = vmatpush1.msra.mxu0 %v47
  %73 = vmatprep.subr.mxu0 0.0
  %74 = vmatpush1.msra.mxu0 %v48
  %75 = vmatprep.subr.mxu0 0.0
  %76 = vmatpush1.msra.mxu0 %v49
  %77 = vmatprep.subr.mxu0 0.0
  %78 = vmatpush1.msra.mxu0 %v50
  %79 = vmatprep.subr.mxu0 0.0
  %80 = vmatpush1.msra.mxu0 %v51
  %81 = vmatprep.subr.mxu0 0.0
  %82 = vmatpush1.msra.mxu0 %v52
  %83 = vmatprep.subr.mxu0 0.0
  %84 = vmatpush1.msra.mxu0 %v53
  %85 = vmatprep.subr.mxu0 0.0
  %86 = vmatpush1.msra.mxu0 %v54
  %87 = vmatprep.subr.mxu0 0.0
  %88 = vmatpush1.msra.mxu0 0.0
  %89 = vmatprep.subr.mxu0 0.0
  %90 = vmatpush1.msra.mxu0 0.0
  %91 = vmatprep.subr.mxu0 0.0
  %92 = vmatpush1.msra.mxu0 0.0
  %93 = vmatprep.subr.mxu0 0.0
  %94 = vmatpush1.msra.mxu0 0.0
  %95 = vmatprep.subr.mxu0 0.0
  %96 = vmatpush1.msra.mxu0 0.0
  %97 = vmatprep.subr.mxu0 0.0
  %98 = vmatpush1.msra.mxu0 0.0
  %99 = vmatprep.subr.mxu0 0.0
  %100 = vmatpush1.msra.mxu0 0.0
  %101 = vmatprep.subr.mxu0 0.0
  %102 = vmatpush1.msra.mxu0 0.0
  %103 = vmatprep.subr.mxu0 0.0
  %104 = vmatpush1.msra.mxu0 0.0
  %105 = vmatprep.subr.mxu0 0.0
  %106 = vmatpush1.msra.mxu0 0.0
  %107 = vmatprep.subr.mxu0 0.0
  %108 = vmatpush1.msra.mxu0 0.0
  %109 = vmatprep.subr.mxu0 0.0
  %110 = vmatpush1.msra.mxu0 0.0
  %111 = vmatprep.subr.mxu0 0.0
  %112 = vmatpush1.msra.mxu0 0.0
  %113 = vmatprep.subr.mxu0 0.0
  %114 = vmatpush1.msra.mxu0 0.0
  %115 = vmatprep.subr.mxu0 0.0
  %116 = vmatpush1.msra.mxu0 0.0
  %117 = vmatprep.subr.mxu0 0.0
  %118 = vmatpush1.msra.mxu0 0.0
  %119 = vmatprep.mubr.f32.mxu0 0.0
  %120 = vmatmul.mubr.f32.gmra.mrb[0].mxu0 %v35
  %v121 = vpop.f32.mrb[0].mxu0
  %v122 = vadd.f32 0.0, %v121
  %v123 = vpop.f32.mrb[0].mxu0
  %124 = vmatprep.mubr.f32.mxu0 0.0
  %125 = vmatmul.mubr.f32.gmra.mrb[0].mxu0 %v36
  %v126 = vpop.f32.mrb[0].mxu0
  %v127 = vadd.f32 0.0, %v126
  %v128 = vpop.f32.mrb[0].mxu0
  %129 = vmatprep.mubr.f32.mxu0 0.0
  %130 = vmatmul.mubr.f32.gmra.mrb[0].mxu0 %v37
  %v131 = vpop.f32.mrb[0].mxu0
  %v132 = vadd.f32 0.0, %v131
  %v133 = vpop.f32.mrb[0].mxu0
  %134 = vmatprep.mubr.f32.mxu0 0.0
  %135 = vmatmul.mubr.f32.gmra.mrb[0].mxu0 %v38
  %v136 = vpop.f32.mrb[0].mxu0
  %v137 = vadd.f32 0.0, %v136
  %v138 = vpop.f32.mrb[0].mxu0
  %139 = vdwg.mxu0
  %141 = vset.pattern.permute.xlu0 0
  %142 = vperm.xlu0 %141, %v31
  %v143 = vpop.permute.xlu0 %142
  %146 = vset.pattern.permute.xlu0 0
  %147 = vperm.xlu0 %146, %v32
  %v148 = vpop.permute.xlu0 %147
  %151 = vset.pattern.permute.xlu0 0
  %152 = vperm.xlu0 %151, %v33
  %v153 = vpop.permute.xlu0 %152
  %156 = vset.pattern.permute.xlu0 0
  %157 = vperm.xlu0 %156, %v34
  %v158 = vpop.permute.xlu0 %157
  %v160 = vmul.f32 %v143, %v122
  %v161 = vmul.f32 %v148, %v127
  %v162 = vmul.f32 %v153, %v132
  %v163 = vmul.f32 %v158, %v137
  %v164 = vpack.c.bf16 %v161, %v160
  %v165 = vpack.c.bf16 %v163, %v162
  %v170 = vunpack.c.l.b16 %v27
  %v171 = vunpack.c.l.b16 %v28
  %v172 = vunpack.c.l.b16 %v29
  %v173 = vunpack.c.l.b16 %v30
  %v174 = vpack.c.b16 %v171, %v170
  %v175 = vpack.c.b16 %v173, %v172
  %vm176 = vcmask 261120
  %v178 = vsel %vm176, %v174, 0
  %v181 = vsel %vm176, %v175, 0
  %183 = vmatprep.subr.bf16.mxu0 0
  %184 = vmatpush1.bf16.msra.mxu0 %v164
  %185 = vmatprep.subr.bf16.mxu0 0
  %186 = vmatpush1.bf16.msra.mxu0 %v165
  %187 = vmatprep.subr.bf16.mxu0 0
  %188 = vmatpush1.bf16.msra.mxu0 0
  %189 = vmatprep.subr.bf16.mxu0 0
  %190 = vmatpush1.bf16.msra.mxu0 0
  %191 = vmatprep.subr.bf16.mxu0 0
  %192 = vmatpush1.bf16.msra.mxu0 0
  %193 = vmatprep.subr.bf16.mxu0 0
  %194 = vmatpush1.bf16.msra.mxu0 0
  %195 = vmatprep.subr.bf16.mxu0 0
  %196 = vmatpush1.bf16.msra.mxu0 0
  %197 = vmatprep.subr.bf16.mxu0 0
  %198 = vmatpush1.bf16.msra.mxu0 0
  %199 = vmatprep.subr.bf16.mxu0 0
  %200 = vmatpush1.bf16.msra.mxu0 0
  %201 = vmatprep.subr.bf16.mxu0 0
  %202 = vmatpush1.bf16.msra.mxu0 0
  %203 = vmatprep.subr.bf16.mxu0 0
  %204 = vmatpush1.bf16.msra.mxu0 0
  %205 = vmatprep.subr.bf16.mxu0 0
  %206 = vmatpush1.bf16.msra.mxu0 0
  %207 = vmatprep.subr.bf16.mxu0 0
  %208 = vmatpush1.bf16.msra.mxu0 0
  %209 = vmatprep.subr.bf16.mxu0 0
  %210 = vmatpush1.bf16.msra.mxu0 0
  %211 = vmatprep.subr.bf16.mxu0 0
  %212 = vmatpush1.bf16.msra.mxu0 0
  %213 = vmatprep.subr.bf16.mxu0 0
  %214 = vmatpush1.bf16.msra.mxu0 0
  %215 = vmatprep.mubr.bf16.mxu0 0
  %216 = vmatmul.mubr.bf16.gmra.mrb[0].mxu0 %v178
  %v217 = vpop.f32.mrb[0].mxu0
  %v218 = vadd.f32 0.0, %v217
  %v219 = vpop.f32.mrb[0].mxu0
  %v220 = vpop.f32.mrb[0].mxu0
  %v221 = vadd.f32 0.0, %v220
  %v222 = vpop.f32.mrb[0].mxu0
  %223 = vmatprep.mubr.bf16.mxu0 0
  %224 = vmatmul.mubr.bf16.gmra.mrb[0].mxu0 %v181
  %v225 = vpop.f32.mrb[0].mxu0
  %v226 = vadd.f32 0.0, %v225
  %v227 = vpop.f32.mrb[0].mxu0
  %v228 = vpop.f32.mrb[0].mxu0
  %v229 = vadd.f32 0.0, %v228
  %v230 = vpop.f32.mrb[0].mxu0
  %231 = vdwg.mxu0
  %v232 = vmul.f32 %v143, %v218
  %v233 = vmul.f32 %v148, %v221
  %v234 = vmul.f32 %v153, %v226
  %v235 = vmul.f32 %v158, %v229
  %v236 = vld [vmem:[%s4] sm:$0x1]
  %v238 = vlaneseq
  %v239 = vshrl.u32 %v238, 7
  %v240 = vsub.s32 0, %v239
  %v241 = vrot.slane %v236, %v240
  %v243 = vadd.f32 %v232, %v241
  %v244 = vadd.f32 %v233, %v241
  %v245 = vadd.f32 %v234, %v241
  %v246 = vadd.f32 %v235, %v241
  %v247 = vmax.f32 %v243, 0.0
  %v248 = vmax.f32 %v244, 0.0
  %v249 = vmax.f32 %v245, 0.0
  %v250 = vmax.f32 %v246, 0.0
  %v251 = vld [vmem:[%s5] sm:$0xff]
  %v252 = vld [vmem:[%s5 + $0x8] sm:$0xff]
  %v253 = vld [vmem:[%s5 + $0x10] sm:$0xff]
  %v254 = vld [vmem:[%s5 + $0x18] sm:$0xff]
  %v255 = vld [vmem:[%s5 + $0x20] sm:$0xff]
  %v256 = vld [vmem:[%s5 + $0x28] sm:$0xff]
  %v257 = vld [vmem:[%s5 + $0x30] sm:$0xff]
  %v258 = vld [vmem:[%s5 + $0x38] sm:$0xff]
  %v259 = vld [vmem:[%s5 + $0x40] sm:$0xff]
  %v260 = vld [vmem:[%s5 + $0x48] sm:$0xff]
  %v261 = vld [vmem:[%s5 + $0x50] sm:$0xff]
  %v262 = vld [vmem:[%s5 + $0x58] sm:$0xff]
  %v263 = vld [vmem:[%s5 + $0x60] sm:$0xff]
  %v264 = vld [vmem:[%s5 + $0x68] sm:$0xff]
  %v265 = vld [vmem:[%s5 + $0x70] sm:$0xff]
  %v266 = vld [vmem:[%s5 + $0x78] sm:$0xff]
  %267 = vmatprep.subr.mxu0 0.0
  %268 = vmatpush1.msra.mxu0 %v251
  %269 = vmatprep.subr.mxu0 0.0
  %270 = vmatpush1.msra.mxu0 %v252
  %271 = vmatprep.subr.mxu0 0.0
  %272 = vmatpush1.msra.mxu0 %v253
  %273 = vmatprep.subr.mxu0 0.0
  %274 = vmatpush1.msra.mxu0 %v254
  %275 = vmatprep.subr.mxu0 0.0
  %276 = vmatpush1.msra.mxu0 %v255
  %277 = vmatprep.subr.mxu0 0.0
  %278 = vmatpush1.msra.mxu0 %v256
  %279 = vmatprep.subr.mxu0 0.0
  %280 = vmatpush1.msra.mxu0 %v257
  %281 = vmatprep.subr.mxu0 0.0
  %282 = vmatpush1.msra.mxu0 %v258
  %283 = vmatprep.subr.mxu0 0.0
  %284 = vmatpush1.msra.mxu0 %v259
  %285 = vmatprep.subr.mxu0 0.0
  %286 = vmatpush1.msra.mxu0 %v260
  %287 = vmatprep.subr.mxu0 0.0
  %288 = vmatpush1.msra.mxu0 %v261
  %289 = vmatprep.subr.mxu0 0.0
  %290 = vmatpush1.msra.mxu0 %v262
  %291 = vmatprep.subr.mxu0 0.0
  %292 = vmatpush1.msra.mxu0 %v263
  %293 = vmatprep.subr.mxu0 0.0
  %294 = vmatpush1.msra.mxu0 %v264
  %295 = vmatprep.subr.mxu0 0.0
  %296 = vmatpush1.msra.mxu0 %v265
  %297 = vmatprep.subr.mxu0 0.0
  %298 = vmatpush1.msra.mxu0 %v266
  %299 = vmatprep.subr.mxu0 0.0
  %300 = vmatpush1.msra.mxu0 0.0
  %301 = vmatprep.subr.mxu0 0.0
  %302 = vmatpush1.msra.mxu0 0.0
  %303 = vmatprep.subr.mxu0 0.0
  %304 = vmatpush1.msra.mxu0 0.0
  %305 = vmatprep.subr.mxu0 0.0
  %306 = vmatpush1.msra.mxu0 0.0
  %307 = vmatprep.subr.mxu0 0.0
  %308 = vmatpush1.msra.mxu0 0.0
  %309 = vmatprep.subr.mxu0 0.0
  %310 = vmatpush1.msra.mxu0 0.0
  %311 = vmatprep.subr.mxu0 0.0
  %312 = vmatpush1.msra.mxu0 0.0
  %313 = vmatprep.subr.mxu0 0.0
  %314 = vmatpush1.msra.mxu0 0.0
  %315 = vmatprep.subr.mxu0 0.0
  %316 = vmatpush1.msra.mxu0 0.0
  %317 = vmatprep.subr.mxu0 0.0
  %318 = vmatpush1.msra.mxu0 0.0
  %319 = vmatprep.subr.mxu0 0.0
  %320 = vmatpush1.msra.mxu0 0.0
  %321 = vmatprep.subr.mxu0 0.0
  %322 = vmatpush1.msra.mxu0 0.0
  %323 = vmatprep.subr.mxu0 0.0
  %324 = vmatpush1.msra.mxu0 0.0
  %325 = vmatprep.subr.mxu0 0.0
  %326 = vmatpush1.msra.mxu0 0.0
  %327 = vmatprep.subr.mxu0 0.0
  %328 = vmatpush1.msra.mxu0 0.0
  %329 = vmatprep.subr.mxu0 0.0
  %330 = vmatpush1.msra.mxu0 0.0
  %331 = vmatprep.mubr.f32.mxu0 0.0
  %332 = vmatmul.mubr.f32.gmra.mrb[0].mxu0 %v247
  %v333 = vpop.f32.mrb[0].mxu0
  %v334 = vadd.f32 0.0, %v333
  %v335 = vpop.f32.mrb[0].mxu0
  %336 = vmatprep.mubr.f32.mxu0 0.0
  %337 = vmatmul.mubr.f32.gmra.mrb[0].mxu0 %v248
  %v338 = vpop.f32.mrb[0].mxu0
  %v339 = vadd.f32 0.0, %v338
  %v340 = vpop.f32.mrb[0].mxu0
  %341 = vmatprep.mubr.f32.mxu0 0.0
  %342 = vmatmul.mubr.f32.gmra.mrb[0].mxu0 %v249
  %v343 = vpop.f32.mrb[0].mxu0
  %v344 = vadd.f32 0.0, %v343
  %v345 = vpop.f32.mrb[0].mxu0
  %346 = vmatprep.mubr.f32.mxu0 0.0
  %347 = vmatmul.mubr.f32.gmra.mrb[0].mxu0 %v250
  %v348 = vpop.f32.mrb[0].mxu0
  %v349 = vadd.f32 0.0, %v348
  %v350 = vpop.f32.mrb[0].mxu0
  %351 = vdwg.mxu0
  %v352 = vmul.f32 %v143, %v334
  %v353 = vmul.f32 %v148, %v339
  %v354 = vmul.f32 %v153, %v344
  %v355 = vmul.f32 %v158, %v349
  %v356 = vpack.c.bf16 %v353, %v352
  %v357 = vpack.c.bf16 %v355, %v354
  %358 = vmatprep.subr.bf16.mxu0 0
  %359 = vmatpush1.bf16.msra.mxu0 %v356
  %360 = vmatprep.subr.bf16.mxu0 0
  %361 = vmatpush1.bf16.msra.mxu0 %v357
  %362 = vmatprep.subr.bf16.mxu0 0
  %363 = vmatpush1.bf16.msra.mxu0 0
  %364 = vmatprep.subr.bf16.mxu0 0
  %365 = vmatpush1.bf16.msra.mxu0 0
  %366 = vmatprep.subr.bf16.mxu0 0
  %367 = vmatpush1.bf16.msra.mxu0 0
  %368 = vmatprep.subr.bf16.mxu0 0
  %369 = vmatpush1.bf16.msra.mxu0 0
  %370 = vmatprep.subr.bf16.mxu0 0
  %371 = vmatpush1.bf16.msra.mxu0 0
  %372 = vmatprep.subr.bf16.mxu0 0
  %373 = vmatpush1.bf16.msra.mxu0 0
  %374 = vmatprep.subr.bf16.mxu0 0
  %375 = vmatpush1.bf16.msra.mxu0 0
  %376 = vmatprep.subr.bf16.mxu0 0
  %377 = vmatpush1.bf16.msra.mxu0 0
  %378 = vmatprep.subr.bf16.mxu0 0
  %379 = vmatpush1.bf16.msra.mxu0 0
  %380 = vmatprep.subr.bf16.mxu0 0
  %381 = vmatpush1.bf16.msra.mxu0 0
  %382 = vmatprep.subr.bf16.mxu0 0
  %383 = vmatpush1.bf16.msra.mxu0 0
  %384 = vmatprep.subr.bf16.mxu0 0
  %385 = vmatpush1.bf16.msra.mxu0 0
  %386 = vmatprep.subr.bf16.mxu0 0
  %387 = vmatpush1.bf16.msra.mxu0 0
  %388 = vmatprep.subr.bf16.mxu0 0
  %389 = vmatpush1.bf16.msra.mxu0 0
  %390 = vmatprep.mubr.bf16.mxu0 0
  %391 = vmatmul.mubr.bf16.gmra.mrb[0].mxu0 %v178
  %v392 = vpop.f32.mrb[0].mxu0
  %v393 = vadd.f32 0.0, %v392
  %v394 = vpop.f32.mrb[0].mxu0
  %v395 = vpop.f32.mrb[0].mxu0
  %v396 = vadd.f32 0.0, %v395
  %v397 = vpop.f32.mrb[0].mxu0
  %398 = vmatprep.mubr.bf16.mxu0 0
  %399 = vmatmul.mubr.bf16.gmra.mrb[0].mxu0 %v181
  %v400 = vpop.f32.mrb[0].mxu0
  %v401 = vadd.f32 0.0, %v400
  %v402 = vpop.f32.mrb[0].mxu0
  %v403 = vpop.f32.mrb[0].mxu0
  %v404 = vadd.f32 0.0, %v403
  %v405 = vpop.f32.mrb[0].mxu0
  %406 = vdwg.mxu0
  %v407 = vmul.f32 %v143, %v393
  %v408 = vmul.f32 %v148, %v396
  %v409 = vmul.f32 %v153, %v401
  %v410 = vmul.f32 %v158, %v404
  %v411 = vld [vmem:[%s6] sm:$0x1]
  %v413 = vlaneseq
  %v414 = vshrl.u32 %v413, 7
  %v415 = vsub.s32 0, %v414
  %v416 = vrot.slane %v411, %v415
  %v418 = vadd.f32 %v407, %v416
  %v419 = vadd.f32 %v408, %v416
  %v420 = vadd.f32 %v409, %v416
  %v421 = vadd.f32 %v410, %v416
  %v422 = vlaneseq
  %v423 = vand.u32 %v422, 127
  %vm424 = vcmp.lt.s32.totalorder %v423, 4
  %v425 = vsel %vm424, %v418, -1e+30
  %v426 = vsel %vm424, %v419, -1e+30
  %v427 = vsel %vm424, %v420, -1e+30
  %v428 = vsel %vm424, %v421, -1e+30
  %429 = vmax.xlane.f32.xlu0 %v425
  %v430 = vpop.xlane.xlu0 %429
  %431 = vmax.xlane.f32.xlu0 %v426
  %v432 = vpop.xlane.xlu0 %431
  %433 = vmax.xlane.f32.xlu0 %v427
  %v434 = vpop.xlane.xlu0 %433
  %435 = vmax.xlane.f32.xlu0 %v428
  %v436 = vpop.xlane.xlu0 %435
  %v437 = vsub.f32 %v425, %v430
  %v438 = vsub.f32 %v426, %v432
  %v439 = vsub.f32 %v427, %v434
  %v440 = vsub.f32 %v428, %v436
  %v441 = vmul.f32 %v437, 1.442695
  %v442 = vpow.pop %v441
  %v443 = vmul.f32 %v438, 1.442695
  %v444 = vpow.pop %v443
  %v445 = vmul.f32 %v439, 1.442695
  %v446 = vpow.pop %v445
  %v447 = vmul.f32 %v440, 1.442695
  %v448 = vpow.pop %v447
  %449 = vadd.xlane.f32.xlu0 %v442
  %v450 = vpop.xlane.xlu0 %449
  %451 = vadd.xlane.f32.xlu0 %v444
  %v452 = vpop.xlane.xlu0 %451
  %453 = vadd.xlane.f32.xlu0 %v446
  %v454 = vpop.xlane.xlu0 %453
  %455 = vadd.xlane.f32.xlu0 %v448
  %v456 = vpop.xlane.xlu0 %455
  %v457 = vlog2.pop %v450
  %v458 = vmul.f32 %v457, 0.6931472
  %v459 = vlog2.pop %v452
  %v460 = vmul.f32 %v459, 0.6931472
  %v461 = vlog2.pop %v454
  %v462 = vmul.f32 %v461, 0.6931472
  %v463 = vlog2.pop %v456
  %v464 = vmul.f32 %v463, 0.6931472
  %v465 = vsub.f32 %v437, %v458
  %v466 = vsub.f32 %v438, %v460
  %v467 = vsub.f32 %v439, %v462
  %v468 = vsub.f32 %v440, %v464
  %469 = vst [vmem:[%s7] sm:$0xff] %v465
  %470 = vst [vmem:[%s7 + $0x8] sm:$0xff] %v466
  %471 = vst [vmem:[%s7 + $0x10] sm:$0xff] %v467
  %472 = vst [vmem:[%s7 + $0x18] sm:$0xff] %v468
  // Predicated region
  $region30: #{pyg_gcn_forward.1} parent=0 // pred_check
    _
  $region31: #{pyg_gcn_forward.1} parent=0 // pred_check_branch
    %474 = sbr.rel (0) target = $region33
  $region32: #{pyg_gcn_forward.1} parent=0 // pred_region
    _
  $region33: #{pyg_gcn_forward.1} parent=0 // pred_fallthru
    _
  // Predicated region
  $region34: #{pyg_gcn_forward.1} parent=0 // pred_check
    _
  $region35: #{pyg_gcn_forward.1} parent=0 // pred_check_branch
    %476 = sbr.rel (0) target = $region37
  $region36: #{pyg_gcn_forward.1} parent=0 // pred_region
    _
  $region37: #{pyg_gcn_forward.1} parent=0 // pred_fallthru
    _

</llo_original>
